<compile_context>
chip_gen: v5e
topology: v5e:2x2
jax: 0.10.0
libtpu: 0.0.40
codegen_flags: <defaults>
</compile_context>

<pallas_src>
import functools

import jax
import jax.numpy as jnp
from jax.experimental import pallas as pl
from jax.experimental.pallas import tpu as pltpu


def conv_h_kernel(x_ref, w_ref, affine_ref, out_ref, *, filter_length,
                  compute_dtype):
    """One grid step: G batch elements, fully fused pool + conv + BN + ReLU.

    x_ref      : (G, C_in, F, T_pad)   time axis pre-padded by K//2 each side
    w_ref      : (C_out, K*C_in)       taps-major flattened conv weight * 1/F
    affine_ref : (C_out, 2)            [:, 0] = fused BN scale, [:, 1] = shift
    out_ref    : (G, C_out, T_out)
    """
    g_size = out_ref.shape[0]
    t_out = out_ref.shape[2]

    w = w_ref[...].astype(compute_dtype)             # tiny, VMEM-resident
    aff = affine_ref[...]
    scale = aff[:, 0:1]                               # (C_out, 1)
    shift = aff[:, 1:2]                               # (C_out, 1)

    # Static unroll over the (small, VMEM-budgeted) batch group.  Per batch:
    # one sublane reduction for the frequency average and ONE deep MXU
    # contraction covering all K taps and all C_in channels.
    for g in range(g_size):
        x_g = x_ref[g].astype(jnp.float32)            # (C_in, F, T_pad)
        # AvgPool2d((F, 1)) + squeeze(2): the 1/F factor is folded into w.
        pooled = jnp.sum(x_g, axis=1)                 # (C_in, T_pad)

        # im2col along the sublane axis: row (k*C_in + ci) <-> weight column
        # (k*C_in + ci).  The per-tap lane offsets are static; folding these
        # shifts into the matmul itself (Toeplitz form) only pays off for much
        # larger K / T, so it is deliberately not done here.
        p = jnp.concatenate(
            [pooled[:, k:k + t_out] for k in range(filter_length)], axis=0
        ).astype(compute_dtype)                       # (K*C_in, T_out)

        acc = jnp.dot(w, p, preferred_element_type=jnp.float32)  # (C_out, T_out)

        # Folded conv-bias + eval-mode BatchNorm + ReLU: one FMA + max.
        out = acc * scale + shift
        out_ref[g] = jnp.maximum(out, 0.0).astype(out_ref.dtype)


def conv_h(x, params, *, eps=1e-5, group_size=None,
           compute_dtype=jnp.float32, vmem_budget_bytes=8 * 1024 * 1024):
    """x: (B, C_in, F, T) -> (B, C_out, T_out). Eval-mode BatchNorm."""
    B, C_in, F, T = x.shape
    weight = params["weight"]                         # (C_out, C_in, K)
    C_out, _, K = weight.shape
    pad = K // 2
    T_pad = T + 2 * pad
    T_out = T_pad - K + 1                             # == PyTorch Conv1d length

    # ---- host-side folding (tiny, per-channel) ----
    # 1/F average folded into the conv weight; taps-major flatten so the
    # kernel's stacked operand rows (k*C_in + ci) line up with the columns.
    w_flat = (jnp.transpose(weight, (0, 2, 1)) / jnp.float32(F)
              ).reshape(C_out, K * C_in)
    inv_std = 1.0 / jnp.sqrt(params["running_var"] + eps)
    scale = params["gamma"] * inv_std
    shift = (params["bias"] - params["running_mean"]) * scale + params["beta"]
    affine = jnp.stack([scale, shift], axis=1)        # (C_out, 2), one array

    # Pre-pad the time axis OUTSIDE the kernel: zero padding commutes with the
    # frequency mean, so no pad concat / lane-zero writes inside the kernel.
    x_pad = jnp.pad(x, ((0, 0), (0, 0), (0, 0), (pad, pad)))

    # ---- batch-group size: amortize per-grid-step overhead while keeping the
    # double-buffered x/out blocks well under the default scoped VMEM on all
    # chips (v5e 16 MiB, v6e/v7x 32 MiB). Raise vmem_limit_bytes in
    # CompilerParams if you deliberately pass a larger group_size. ----
    if group_size is None:
        per_batch = 2 * (C_in * F * T_pad * x.dtype.itemsize      # x block (dbl-buffered)
                         + C_out * T_out * x.dtype.itemsize)      # out block (dbl-buffered)
        group_size = int(max(1, min(B, vmem_budget_bytes // max(per_batch, 1))))
    G = int(group_size)
    num_steps = -(-B // G)
    B_padded = num_steps * G
    if B_padded != B:
        # Zero-padded batches produce finite garbage that is sliced off below.
        x_pad = jnp.pad(x_pad, ((0, B_padded - B), (0, 0), (0, 0), (0, 0)))

    kernel = functools.partial(conv_h_kernel, filter_length=K,
                               compute_dtype=compute_dtype)

    out = pl.pallas_call(
        kernel,
        out_shape=jax.ShapeDtypeStruct((B_padded, C_out, T_out), x.dtype),
        grid_spec=pltpu.PrefetchScalarGridSpec(
            num_scalar_prefetch=0,
            grid=(num_steps,),
            in_specs=[
                pl.BlockSpec((G, C_in, F, T_pad), lambda b: (b, 0, 0, 0)),  # x
                pl.BlockSpec((C_out, K * C_in), lambda b: (0, 0)),          # fused W (resident)
                pl.BlockSpec((C_out, 2), lambda b: (0, 0)),                 # scale|shift (resident)
            ],
            out_specs=pl.BlockSpec((G, C_out, T_out), lambda b: (b, 0, 0)),
        ),
        compiler_params=pltpu.CompilerParams(
            dimension_semantics=("parallel",)),
    )(x_pad, w_flat, affine)

    return out[:B] if B_padded != B else out


def conv_h_reference(x, params, *, eps=1e-5):
    """Pure-JAX reference matching the PyTorch forward (eval mode)."""
    pooled = jnp.mean(x, axis=2)                      # (B, C_in, T)
    K = params["weight"].shape[-1]
    pad = K // 2
    out = jax.lax.conv_general_dilated(
        pooled, params["weight"], window_strides=(1,), padding=[(pad, pad)],
        dimension_numbers=("NCH", "OIH", "NCH"))
    out = out + params["bias"][None, :, None]
    inv_std = 1.0 / jnp.sqrt(params["running_var"] + eps)
    out = (out - params["running_mean"][None, :, None]) * inv_std[None, :, None]
    out = out * params["gamma"][None, :, None] + params["beta"][None, :, None]
    return jnp.maximum(out, 0.0)


if __name__ == "__main__":
    # Small config consistent with the module: batch=2, in-channels=4,
    # freq-bins=16, time-steps=16, out-channels=8, filter_length=5.
    B, C_in, F, T = 2, 4, 16, 16
    C_out, K = 8, 5

    key = jax.random.PRNGKey(0)
    ks = jax.random.split(key, 7)

    params = {
        "weight": jax.random.normal(ks[0], (C_out, C_in, K), jnp.float32) * 0.1,
        "bias": jax.random.normal(ks[1], (C_out,), jnp.float32) * 0.05,
        "gamma": jax.random.normal(ks[2], (C_out,), jnp.float32) * 0.1 + 1.0,
        "beta": jax.random.normal(ks[3], (C_out,), jnp.float32) * 0.05,
        "running_mean": jax.random.normal(ks[4], (C_out,), jnp.float32) * 0.1,
        "running_var": jax.random.uniform(ks[5], (C_out,), jnp.float32,
                                          minval=0.5, maxval=1.5),
    }

    x = jax.random.normal(ks[6], (B, C_in, F, T), jnp.float32)

    out = conv_h(x, params)
    out = jax.block_until_ready(out)

    ref = conv_h_reference(x, params)
    assert out.shape == ref.shape, (out.shape, ref.shape)
    assert jnp.allclose(out, ref, atol=1e-3, rtol=1e-3), "mismatch vs reference"

    print("KERNEL_OK")
</pallas_src>

<mosaic_0001>
module attributes {stable_mosaic.version = 11 : i64} {
  func.func @conv_h_kernel(%arg0: i32, %arg1: memref<2x4x16x20xf32, #tpu.memory_space<vmem>>, %arg2: memref<8x20xf32, #tpu.memory_space<vmem>>, %arg3: memref<8x2xf32, #tpu.memory_space<vmem>>, %arg4: memref<2x8x16xf32, #tpu.memory_space<vmem>>) attributes {dimension_semantics = [#tpu.dimension_semantics<parallel>], iteration_bounds = array<i64: 1>, scalar_prefetch = 0 : i64, scratch_operands = 0 : i64, tpu.core_type = #tpu.core_type<tc>, window_params = [{transform_indices = @transform_0, window_bounds = array<i64: 2, 4, 16, 20>}, {pipeline_mode = #tpu.pipeline_mode<synchronous>, transform_indices = @transform_1, window_bounds = array<i64: 8, 20>}, {pipeline_mode = #tpu.pipeline_mode<synchronous>, transform_indices = @transform_2, window_bounds = array<i64: 8, 2>}, {transform_indices = @transform_3, window_bounds = array<i64: 2, 8, 16>}]} {
    %c0 = arith.constant 0 : index
    %c0_0 = arith.constant 0 : index
    %0 = vector.load %arg2[%c0, %c0_0] : memref<8x20xf32, #tpu.memory_space<vmem>>, vector<8x20xf32>
    %c0_1 = arith.constant 0 : index
    %c0_2 = arith.constant 0 : index
    %1 = vector.load %arg3[%c0_1, %c0_2] : memref<8x2xf32, #tpu.memory_space<vmem>>, vector<8x2xf32>
    %2 = vector.extract_strided_slice %1 {offsets = [0, 0], sizes = [8, 1], strides = [1, 1]} : vector<8x2xf32> to vector<8x1xf32>
    %3 = vector.extract_strided_slice %1 {offsets = [0, 1], sizes = [8, 1], strides = [1, 1]} : vector<8x2xf32> to vector<8x1xf32>
    %c0_3 = arith.constant 0 : index
    %c0_4 = arith.constant 0 : index
    %c0_5 = arith.constant 0 : index
    %c0_6 = arith.constant 0 : index
    %4 = vector.load %arg1[%c0_3, %c0_4, %c0_5, %c0_6] : memref<2x4x16x20xf32, #tpu.memory_space<vmem>>, vector<1x4x16x20xf32>
    %5 = vector.shape_cast %4 : vector<1x4x16x20xf32> to vector<4x16x20xf32>
    %cst = arith.constant dense<0.000000e+00> : vector<4x20xf32>
    %6 = vector.multi_reduction <add>, %5, %cst [1] : vector<4x16x20xf32> to vector<4x20xf32>
    %7 = vector.extract_strided_slice %6 {offsets = [0, 0], sizes = [4, 16], strides = [1, 1]} : vector<4x20xf32> to vector<4x16xf32>
    %8 = vector.extract_strided_slice %6 {offsets = [0, 1], sizes = [4, 16], strides = [1, 1]} : vector<4x20xf32> to vector<4x16xf32>
    %9 = vector.extract_strided_slice %6 {offsets = [0, 2], sizes = [4, 16], strides = [1, 1]} : vector<4x20xf32> to vector<4x16xf32>
    %10 = vector.extract_strided_slice %6 {offsets = [0, 3], sizes = [4, 16], strides = [1, 1]} : vector<4x20xf32> to vector<4x16xf32>
    %11 = vector.extract_strided_slice %6 {offsets = [0, 4], sizes = [4, 16], strides = [1, 1]} : vector<4x20xf32> to vector<4x16xf32>
    %12 = tpu.concatenate %7, %8, %9, %10, %11 in 0 : vector<4x16xf32>, vector<4x16xf32>, vector<4x16xf32>, vector<4x16xf32>, vector<4x16xf32> -> vector<20x16xf32>
    %cst_7 = arith.constant dense<0.000000e+00> : vector<8x16xf32>
    %13 = tpu.matmul %0, %12, %cst_7 {dimension_numbers = #tpu.dot_dimension_numbers<[1], [0], [0], [1], [0, 0, 1, 1], [], []>} : vector<8x20xf32>, vector<20x16xf32>, vector<8x16xf32> -> vector<8x16xf32>
    %14 = vector.broadcast %2 : vector<8x1xf32> to vector<8x16xf32>
    %15 = arith.mulf %13, %14 : vector<8x16xf32>
    %16 = vector.broadcast %3 : vector<8x1xf32> to vector<8x16xf32>
    %17 = arith.addf %15, %16 : vector<8x16xf32>
    %cst_8 = arith.constant 0.000000e+00 : f32
    %18 = vector.broadcast %cst_8 : f32 to vector<8x16xf32>
    %19 = arith.maximumf %17, %18 : vector<8x16xf32>
    %c0_9 = arith.constant 0 : index
    %c0_10 = arith.constant 0 : index
    %c0_11 = arith.constant 0 : index
    %20 = vector.load %arg4[%c0_9, %c0_10, %c0_11] : memref<2x8x16xf32, #tpu.memory_space<vmem>>, vector<1x8x16xf32>
    %21 = vector.shape_cast %20 : vector<1x8x16xf32> to vector<8x16xf32>
    %22 = vector.shape_cast %19 : vector<8x16xf32> to vector<1x8x16xf32>
    tpu.vector_store %arg4[%c0_9, %c0_10, %c0_11], %22 {strides = array<i32>} : memref<2x8x16xf32, #tpu.memory_space<vmem>>, vector<1x8x16xf32>,
    %c1 = arith.constant 1 : index
    %c0_12 = arith.constant 0 : index
    %c0_13 = arith.constant 0 : index
    %c0_14 = arith.constant 0 : index
    %23 = vector.load %arg1[%c1, %c0_12, %c0_13, %c0_14] : memref<2x4x16x20xf32, #tpu.memory_space<vmem>>, vector<1x4x16x20xf32>
    %24 = vector.shape_cast %23 : vector<1x4x16x20xf32> to vector<4x16x20xf32>
    %cst_15 = arith.constant dense<0.000000e+00> : vector<4x20xf32>
    %25 = vector.multi_reduction <add>, %24, %cst_15 [1] : vector<4x16x20xf32> to vector<4x20xf32>
    %26 = vector.extract_strided_slice %25 {offsets = [0, 0], sizes = [4, 16], strides = [1, 1]} : vector<4x20xf32> to vector<4x16xf32>
    %27 = vector.extract_strided_slice %25 {offsets = [0, 1], sizes = [4, 16], strides = [1, 1]} : vector<4x20xf32> to vector<4x16xf32>
    %28 = vector.extract_strided_slice %25 {offsets = [0, 2], sizes = [4, 16], strides = [1, 1]} : vector<4x20xf32> to vector<4x16xf32>
    %29 = vector.extract_strided_slice %25 {offsets = [0, 3], sizes = [4, 16], strides = [1, 1]} : vector<4x20xf32> to vector<4x16xf32>
    %30 = vector.extract_strided_slice %25 {offsets = [0, 4], sizes = [4, 16], strides = [1, 1]} : vector<4x20xf32> to vector<4x16xf32>
    %31 = tpu.concatenate %26, %27, %28, %29, %30 in 0 : vector<4x16xf32>, vector<4x16xf32>, vector<4x16xf32>, vector<4x16xf32>, vector<4x16xf32> -> vector<20x16xf32>
    %cst_16 = arith.constant dense<0.000000e+00> : vector<8x16xf32>
    %32 = tpu.matmul %0, %31, %cst_16 {dimension_numbers = #tpu.dot_dimension_numbers<[1], [0], [0], [1], [0, 0, 1, 1], [], []>} : vector<8x20xf32>, vector<20x16xf32>, vector<8x16xf32> -> vector<8x16xf32>
    %33 = vector.broadcast %2 : vector<8x1xf32> to vector<8x16xf32>
    %34 = arith.mulf %32, %33 : vector<8x16xf32>
    %35 = vector.broadcast %3 : vector<8x1xf32> to vector<8x16xf32>
    %36 = arith.addf %34, %35 : vector<8x16xf32>
    %cst_17 = arith.constant 0.000000e+00 : f32
    %37 = vector.broadcast %cst_17 : f32 to vector<8x16xf32>
    %38 = arith.maximumf %36, %37 : vector<8x16xf32>
    %c1_18 = arith.constant 1 : index
    %c0_19 = arith.constant 0 : index
    %c0_20 = arith.constant 0 : index
    %39 = vector.load %arg4[%c1_18, %c0_19, %c0_20] : memref<2x8x16xf32, #tpu.memory_space<vmem>>, vector<1x8x16xf32>
    %40 = vector.shape_cast %39 : vector<1x8x16xf32> to vector<8x16xf32>
    %41 = vector.shape_cast %38 : vector<8x16xf32> to vector<1x8x16xf32>
    tpu.vector_store %arg4[%c1_18, %c0_19, %c0_20], %41 {strides = array<i32>} : memref<2x8x16xf32, #tpu.memory_space<vmem>>, vector<1x8x16xf32>,
    return
  }
  func.func @transform_0(%arg0: i32) -> (i32, i32, i32, i32) {
    %c0_i32 = arith.constant 0 : i32
    %c0_i32_0 = arith.constant 0 : i32
    %c0_i32_1 = arith.constant 0 : i32
    %c0_i32_2 = arith.constant 0 : i32
    return %arg0, %c0_i32, %c0_i32_0, %c0_i32_1 : i32, i32, i32, i32
  }
  func.func @transform_1(%arg0: i32) -> (i32, i32) {
    %c0_i32 = arith.constant 0 : i32
    %c0_i32_0 = arith.constant 0 : i32
    %c0_i32_1 = arith.constant 0 : i32
    return %c0_i32, %c0_i32_0 : i32, i32
  }
  func.func @transform_2(%arg0: i32) -> (i32, i32) {
    %c0_i32 = arith.constant 0 : i32
    %c0_i32_0 = arith.constant 0 : i32
    %c0_i32_1 = arith.constant 0 : i32
    return %c0_i32, %c0_i32_0 : i32, i32
  }
  func.func @transform_3(%arg0: i32) -> (i32, i32, i32) {
    %c0_i32 = arith.constant 0 : i32
    %c0_i32_0 = arith.constant 0 : i32
    %c0_i32_1 = arith.constant 0 : i32
    return %arg0, %c0_i32, %c0_i32_0 : i32, i32, i32
  }
}

</mosaic_0001>

<llo_original>
// kernel: tpu_custom_call.1
$region0: #{tpu_custom_call.1}
  #allocation0 [shape = 'u32[]', space=smem, size = 0x4, offset = 0x4, fixed_abs, tag = 'smem constant byte address 0x4 - core index']
  #allocation1 [shape = 'u32[72,128]{1,0:T(1,128)}', space=vmem, size = 0x9000, scoped, tag = 'internal scratch']
  %s0 = inlined_call_operand.hbm [shape: f32[2,4,16,20], index: 0, kind: input, shape index: {}]
  %s1 = inlined_call_operand.vmem [shape: f32[8,20], index: 1, kind: input, shape index: {}]
  %s2 = inlined_call_operand.vmem [shape: f32[8,2], index: 2, kind: input, shape index: {}]
  %s3 = inlined_call_operand.hbm [shape: f32[2,8,16], index: 3, kind: output, shape index: {}]
  %s4 = sld [smem:[#allocation0]]
  $region26: #{tpu_custom_call.1} parent=0
    _
  %s6 = ssub.s32 1, %s4
  %s7 = scalar_select 0, %s6, %s4
  $region1: #{tpu_custom_call.1} parent=0
    #allocation2 [shape = 'u8[65536]{0}', space=vmem, size = 0x10000, scoped, tag = 'input window, operand 0, single buffered']
    #allocation3 [shape = 's32[1]{0}', space=sflag, size = 0x4, scoped, tag = 'scoped memory for tpu_custom_call.1']
    #allocation4 [shape = 's32[1]{0}', space=sflag, size = 0x4, scoped, tag = 'scoped memory for tpu_custom_call.1']
    #allocation5 [shape = 'u8[8192]{0}', space=vmem, size = 0x2000, scoped, tag = 'output window, operand 0, single buffered']
    %8 = vsyncpa [#allocation3], 0
    %9 = vsyncpa [#allocation4], 0
    // Predicated region
    $region2: #{tpu_custom_call.1} parent=1 // pred_check
      _
    $region3: #{tpu_custom_call.1} parent=1 // pred_check_branch
      %11 = sbr.rel (0) target = $region5
    $region4: #{tpu_custom_call.1} parent=1 // pred_region
      %13 = vsyncadd [#allocation3], 0
      %s14 = sshll.u32 %s0, 4
      %s15 = int_to_ptr.hbm [resolvable:$true] %s14
      %s16 = sshll.u32 [#allocation2], 4
      %s17 = int_to_ptr.vmem [resolvable:$true] %s16
      %22 = dma.hbm_to_vmem [thread:$0]  %s15, 2048, %s17, [#allocation3], 128, 128, 8
    $region5: #{tpu_custom_call.1} parent=1 // pred_fallthru
      _
    // Predicated region
    $region6: #{tpu_custom_call.1} parent=1 // pred_check
      _
    $region7: #{tpu_custom_call.1} parent=1 // pred_check_branch
      %24 = sbr.rel (0) target = $region9
    $region8: #{tpu_custom_call.1} parent=1 // pred_region
      _
    $region9: #{tpu_custom_call.1} parent=1 // pred_fallthru
      _
    // Predicated region
    $region10: #{tpu_custom_call.1} parent=1 // pred_check
      _
    $region11: #{tpu_custom_call.1} parent=1 // pred_check_branch
      %26 = sbr.rel (0) target = $region13
    $region12: #{tpu_custom_call.1} parent=1 // pred_region
      _
    $region13: #{tpu_custom_call.1} parent=1 // pred_fallthru
      _
    // Predicated region
    $region14: #{tpu_custom_call.1} parent=1 // pred_check
      _
    $region15: #{tpu_custom_call.1} parent=1 // pred_check_branch
      %28 = sbr.rel (0) target = $region17
    $region16: #{tpu_custom_call.1} parent=1 // pred_region
      %30 = dma.done [#allocation3], 2048
    $region17: #{tpu_custom_call.1} parent=1 // pred_fallthru
      _
    %v31 = vld [vmem:[%s1] sm:$0xff]
    %v32 = vld [vmem:[%s2] sm:$0xff]
    %v33 = vld [vmem:[#allocation2] sm:$0xff]
    %v34 = vld [vmem:[#allocation2 + $0x8] sm:$0xff]
    %v35 = vld [vmem:[#allocation2 + $0x10] sm:$0xff]
    %v36 = vld [vmem:[#allocation2 + $0x18] sm:$0xff]
    %v37 = vld [vmem:[#allocation2 + $0x20] sm:$0xff]
    %v38 = vld [vmem:[#allocation2 + $0x28] sm:$0xff]
    %v39 = vld [vmem:[#allocation2 + $0x30] sm:$0xff]
    %v40 = vld [vmem:[#allocation2 + $0x38] sm:$0xff]
    %vm41 = vcmask 162816
    %v42 = vsel %vm41, %v33, 0.0
    %v43 = vsel %vm41, %v34, 0.0
    %v44 = vadd.f32 %v42, %v43
    %v45 = vrot.slane %v44, 4
    %v46 = vadd.f32 %v44, %v45
    %v47 = vrot.slane %v46, 2
    %v48 = vadd.f32 %v46, %v47
    %v49 = vrot.slane %v48, 1
    %v50 = vadd.f32 %v48, %v49
    %v51 = vsel %vm41, %v35, 0.0
    %v52 = vsel %vm41, %v36, 0.0
    %v53 = vadd.f32 %v51, %v52
    %v54 = vrot.slane %v53, 4
    %v55 = vadd.f32 %v53, %v54
    %v56 = vrot.slane %v55, 2
    %v57 = vadd.f32 %v55, %v56
    %v58 = vrot.slane %v57, 1
    %v59 = vadd.f32 %v57, %v58
    %v60 = vsel %vm41, %v37, 0.0
    %v61 = vsel %vm41, %v38, 0.0
    %v62 = vadd.f32 %v60, %v61
    %v63 = vrot.slane %v62, 4
    %v64 = vadd.f32 %v62, %v63
    %v65 = vrot.slane %v64, 2
    %v66 = vadd.f32 %v64, %v65
    %v67 = vrot.slane %v66, 1
    %v68 = vadd.f32 %v66, %v67
    %v69 = vsel %vm41, %v39, 0.0
    %v70 = vsel %vm41, %v40, 0.0
    %v71 = vadd.f32 %v69, %v70
    %v72 = vrot.slane %v71, 4
    %v73 = vadd.f32 %v71, %v72
    %v74 = vrot.slane %v73, 2
    %v75 = vadd.f32 %v73, %v74
    %v76 = vrot.slane %v75, 1
    %v77 = vadd.f32 %v75, %v76
    %vm82 = vcmask 1041409
    %v83 = vsel %vm82, %v59, %v50
    %vm84 = vcmask 1042434
    %v85 = vsel %vm84, %v68, %v83
    %vm86 = vcmask 1043459
    %v87 = vsel %vm86, %v77, %v85
    %vm89 = vcmask 1045509
    %v90 = vsel %vm89, %v59, %v50
    %vm91 = vcmask 1046534
    %v92 = vsel %vm91, %v68, %v90
    %vm93 = vcmask 1047559
    %v94 = vsel %vm93, %v77, %v92
    %95 = vrot.lane.b32.xlu0 %v94, 127
    %v96 = vpop.permute.xlu0 %95
    %98 = vrot.lane.b32.xlu0 %v87, 126
    %v99 = vpop.permute.xlu0 %98
    %101 = vrot.lane.b32.xlu0 %v94, 125
    %v102 = vpop.permute.xlu0 %101
    %104 = vrot.lane.b32.xlu0 %v87, 124
    %v105 = vpop.permute.xlu0 %104
    %vm106 = vcmask 1043456
    %v107 = vsel %vm106, %v87, %v96
    %v108 = vsel %vm106, %v99, %v102
    %v110 = vsel %vm41, %v31, 0
    %v112 = vsel %vm106, %v105, 0
    %114 = vmatpush.msra.mxu0 0.0
    %115 = vmatpush.msra.mxu0 0.0
    %116 = vmatpush.msra.mxu0 0.0
    %117 = vmatpush.msra.mxu0 0.0
    %118 = vmatpush.msra.mxu0 0.0
    %119 = vmatpush.msra.mxu0 0.0
    %120 = vmatpush.msra.mxu0 0.0
    %121 = vmatpush.msra.mxu0 0.0
    %122 = vmatpush.msra.mxu0 0.0
    %123 = vmatpush.msra.mxu0 0.0
    %124 = vmatpush.msra.mxu0 0.0
    %125 = vmatpush.msra.mxu0 0.0
    %126 = vmatpush.msra.mxu0 0.0
    %127 = vmatpush.msra.mxu0 %v112
    %128 = vmatpush.msra.mxu0 %v108
    %129 = vmatpush.msra.mxu0 %v107
    %130 = vmatmul.f32.gmra.mxu0 %v110
    %v131 = vpop.f32.mrf.mxu0
    %v132 = vadd.f32 0.0, %v131
    %133 = vdwg.mxu0
    %135 = vset.pattern.permute.xlu0 0
    %136 = vperm.xlu0 %135, %v32
    %v137 = vpop.permute.xlu0 %136
    %v139 = vmul.f32 %v132, %v137
    %140 = vset.pattern.permute.xlu0 1
    %141 = vperm.xlu0 %140, %v32
    %v142 = vpop.permute.xlu0 %141
    %v144 = vadd.f32 %v139, %v142
    %v145 = vmax.f32 %v144, 0.0
    %vm146 = vcmask 130048
    %147 = vst.msk [vmem:[#allocation5] sm:$0xff] %vm146, %v145
    %s148 = scalar_lea.vmem [#allocation2], 64
    %v149 = vld [vmem:[%s148] sm:$0xff]
    %v150 = vld [vmem:[%s148 + $0x8] sm:$0xff]
    %v151 = vld [vmem:[%s148 + $0x10] sm:$0xff]
    %v152 = vld [vmem:[%s148 + $0x18] sm:$0xff]
    %v153 = vld [vmem:[%s148 + $0x20] sm:$0xff]
    %v154 = vld [vmem:[%s148 + $0x28] sm:$0xff]
    %v155 = vld [vmem:[%s148 + $0x30] sm:$0xff]
    %v156 = vld [vmem:[%s148 + $0x38] sm:$0xff]
    %v157 = vsel %vm41, %v149, 0.0
    %v158 = vsel %vm41, %v150, 0.0
    %v159 = vadd.f32 %v157, %v158
    %v160 = vrot.slane %v159, 4
    %v161 = vadd.f32 %v159, %v160
    %v162 = vrot.slane %v161, 2
    %v163 = vadd.f32 %v161, %v162
    %v164 = vrot.slane %v163, 1
    %v165 = vadd.f32 %v163, %v164
    %v166 = vsel %vm41, %v151, 0.0
    %v167 = vsel %vm41, %v152, 0.0
    %v168 = vadd.f32 %v166, %v167
    %v169 = vrot.slane %v168, 4
    %v170 = vadd.f32 %v168, %v169
    %v171 = vrot.slane %v170, 2
    %v172 = vadd.f32 %v170, %v171
    %v173 = vrot.slane %v172, 1
    %v174 = vadd.f32 %v172, %v173
    %v175 = vsel %vm41, %v153, 0.0
    %v176 = vsel %vm41, %v154, 0.0
    %v177 = vadd.f32 %v175, %v176
    %v178 = vrot.slane %v177, 4
    %v179 = vadd.f32 %v177, %v178
    %v180 = vrot.slane %v179, 2
    %v181 = vadd.f32 %v179, %v180
    %v182 = vrot.slane %v181, 1
    %v183 = vadd.f32 %v181, %v182
    %v184 = vsel %vm41, %v155, 0.0
    %v185 = vsel %vm41, %v156, 0.0
    %v186 = vadd.f32 %v184, %v185
    %v187 = vrot.slane %v186, 4
    %v188 = vadd.f32 %v186, %v187
    %v189 = vrot.slane %v188, 2
    %v190 = vadd.f32 %v188, %v189
    %v191 = vrot.slane %v190, 1
    %v192 = vadd.f32 %v190, %v191
    %v197 = vsel %vm82, %v174, %v165
    %v198 = vsel %vm84, %v183, %v197
    %v199 = vsel %vm86, %v192, %v198
    %v201 = vsel %vm89, %v174, %v165
    %v202 = vsel %vm91, %v183, %v201
    %v203 = vsel %vm93, %v192, %v202
    %204 = vrot.lane.b32.xlu0 %v203, 127
    %v205 = vpop.permute.xlu0 %204
    %207 = vrot.lane.b32.xlu0 %v199, 126
    %v208 = vpop.permute.xlu0 %207
    %210 = vrot.lane.b32.xlu0 %v203, 125
    %v211 = vpop.permute.xlu0 %210
    %213 = vrot.lane.b32.xlu0 %v199, 124
    %v214 = vpop.permute.xlu0 %213
    %v215 = vsel %vm106, %v199, %v205
    %v216 = vsel %vm106, %v208, %v211
    %v217 = vsel %vm106, %v214, 0
    %219 = vmatpush.msra.mxu0 0.0
    %220 = vmatpush.msra.mxu0 0.0
    %221 = vmatpush.msra.mxu0 0.0
    %222 = vmatpush.msra.mxu0 0.0
    %223 = vmatpush.msra.mxu0 0.0
    %224 = vmatpush.msra.mxu0 0.0
    %225 = vmatpush.msra.mxu0 0.0
    %226 = vmatpush.msra.mxu0 0.0
    %227 = vmatpush.msra.mxu0 0.0
    %228 = vmatpush.msra.mxu0 0.0
    %229 = vmatpush.msra.mxu0 0.0
    %230 = vmatpush.msra.mxu0 0.0
    %231 = vmatpush.msra.mxu0 0.0
    %232 = vmatpush.msra.mxu0 %v217
    %233 = vmatpush.msra.mxu0 %v216
    %234 = vmatpush.msra.mxu0 %v215
    %235 = vmatmul.f32.gmra.mxu0 %v110
    %v236 = vpop.f32.mrf.mxu0
    %v237 = vadd.f32 0.0, %v236
    %238 = vdwg.mxu0
    %v239 = vmul.f32 %v237, %v137
    %v240 = vadd.f32 %v239, %v142
    %v241 = vmax.f32 %v240, 0.0
    %s242 = scalar_lea.vmem [#allocation5], 8
    %243 = vst.msk [vmem:[%s242] sm:$0xff] %vm146, %v241
    // Predicated region
    $region18: #{tpu_custom_call.1} parent=1 // pred_check
      _
    $region19: #{tpu_custom_call.1} parent=1 // pred_check_branch
      %245 = sbr.rel (0) target = $region21
    $region20: #{tpu_custom_call.1} parent=1 // pred_region
      %247 = vsyncadd [#allocation4], 0
      %s248 = sshll.u32 [#allocation5], 4
      %s249 = int_to_ptr.vmem [resolvable:$true] %s248
      %s250 = sshll.u32 %s3, 4
      %s251 = int_to_ptr.hbm [resolvable:$true] %s250
      %256 = dma.vmem_to_hbm [thread:$0]  %s249, 256, %s251, [#allocation4], 128, 128, 8
    $region21: #{tpu_custom_call.1} parent=1 // pred_fallthru
      _
    // Predicated region
    $region22: #{tpu_custom_call.1} parent=1 // pred_check
      _
    $region23: #{tpu_custom_call.1} parent=1 // pred_check_branch
      %258 = sbr.rel (0) target = $region25
    $region24: #{tpu_custom_call.1} parent=1 // pred_region
      %260 = dma.done [#allocation4], 256
    $region25: #{tpu_custom_call.1} parent=1 // pred_fallthru
      _
    %261 = vsyncpa [#allocation3], 1
    %262 = vsyncpa [#allocation4], 1

</llo_original>
